<compile_context>
chip_gen: v6e
topology: v6e:2x2x1
jax: 0.10.0
libtpu: 0.0.40
codegen_flags: <defaults>
</compile_context>

<pallas_src>
import functools

import jax
import jax.numpy as jnp
import numpy as np
from jax.experimental import pallas as pl
from jax.experimental.pallas import tpu as pltpu


def _prenet_kernel(seed_ref, x_ref, w1_ref, b1_ref, w2_ref, b2_ref, o_ref,
                   *, train: bool, p: float):
    """relu(x@W1+b1) -> dropout -> relu(.@W2+b2) -> dropout (one M-tile)."""
    if train:
        # Decorrelate tiles: large odd multiplier so (seed, tile) pairs never
        # collide across calls / adjacent seeds (int32 wrap is fine).
        pltpu.prng_seed(seed_ref[0] + pl.program_id(0) * jnp.int32(506952113))
        keep_scale = jnp.float32(1.0 / (1.0 - p))
        thresh = jnp.uint32(min(int(p * 4294967296.0), 4294967295))

    # fc1: in-kernel f32->bf16 cast of the x tile (no separate HBM convert
    # pass), bf16 MXU matmul with f32 accumulation; bias + ReLU in f32.
    h = jnp.dot(x_ref[...].astype(jnp.bfloat16), w1_ref[...],
                preferred_element_type=jnp.float32)
    h = jnp.maximum(h + b1_ref[...], 0.0)

    # Cast once for fc2.  First dropout is a plain select on the bf16 copy;
    # its 1/(1-p) rescale has been folded into W2 in the wrapper.
    h = h.astype(w2_ref.dtype)
    if train:
        bits = pltpu.bitcast(pltpu.prng_random_bits(h.shape), jnp.uint32)
        h = jnp.where(bits >= thresh, h, jnp.zeros_like(h))

    # fc2: bf16 MXU matmul, f32 accumulate; bias + ReLU in f32.
    y = jnp.dot(h, w2_ref[...], preferred_element_type=jnp.float32)
    y = jnp.maximum(y + b2_ref[...], 0.0)

    if train:
        bits2 = pltpu.bitcast(pltpu.prng_random_bits(y.shape), jnp.uint32)
        y = jnp.where(bits2 >= thresh, y * keep_scale, 0.0)

    o_ref[...] = y.astype(o_ref.dtype)


def prenet_forward(x, w1, b1, w2, b2, *, train=False, p=0.5, seed=0,
                   tm=2048, out_dtype=None, vmem_limit_bytes=None):
    """x: [B, T, in_dim] -> [B, T, 128].

    w1: [in_dim, 256] (transposed PyTorch fc1.weight), b1: [256]
    w2: [256, 128]    (transposed PyTorch fc2.weight), b2: [128]
    out_dtype: output dtype (default: x.dtype; pass jnp.bfloat16 to halve the
               output HBM writeback).
    """
    B, T, D = x.shape
    M = B * T
    H1 = w1.shape[1]
    H2 = w2.shape[1]
    out_dtype = jnp.dtype(x.dtype if out_dtype is None else out_dtype)

    if train and not (0.0 <= p < 1.0):
        raise ValueError("dropout p must be in [0, 1) in train mode")

    # Tile selection:
    #  * tm >= M: one full-array block (allowed regardless of the (8,128)
    #    rule), except for large M where a 2-way split lets the "parallel"
    #    grid axis use both v7x TensorCores.
    #  * tm <  M: clamp to a multiple of 8 (BlockSpec constraint); ragged edge
    #    tiles are handled by Pallas block padding.
    if tm >= M:
        TM = M // 2 if (M >= 4096 and M % 16 == 0) else M
    else:
        TM = max(8, (min(tm, M) // 8) * 8)
    grid_m = pl.cdiv(M, TM)

    x2d = x.reshape(M, D)                       # native dtype; cast in-kernel
    w1b = jnp.asarray(w1, jnp.bfloat16)
    # Fold the first dropout's 1/(1-p) rescale into W2 (train mode only).
    w2_eff = w2 * (1.0 / (1.0 - p)) if train else w2
    w2b = jnp.asarray(w2_eff, jnp.bfloat16)
    b1_2d = jnp.asarray(b1, jnp.float32).reshape(1, H1)
    b2_2d = jnp.asarray(b2, jnp.float32).reshape(1, H2)
    seed_arr = jnp.asarray([seed], dtype=jnp.int32)

    kernel = functools.partial(_prenet_kernel, train=train, p=p)

    cost = pl.CostEstimate(
        flops=2 * M * (D * H1 + H1 * H2),
        transcendentals=0,
        bytes_accessed=(M * D * jnp.dtype(x.dtype).itemsize   # x read (no convert pass)
                        + D * H1 * 2 + H1 * H2 * 2            # bf16 weights
                        + H1 * 4 + H2 * 4                     # f32 biases
                        + M * H2 * out_dtype.itemsize),       # output write
    )

    out2d = pl.pallas_call(
        kernel,
        out_shape=jax.ShapeDtypeStruct((M, H2), out_dtype),
        grid_spec=pltpu.PrefetchScalarGridSpec(
            num_scalar_prefetch=1,          # seed -> SMEM
            grid=(grid_m,),
            in_specs=[
                pl.BlockSpec((TM, D), lambda i, s: (i, 0)),   # x tile (pipelined)
                pl.BlockSpec((D, H1), lambda i, s: (0, 0)),   # W1 (VMEM-resident)
                pl.BlockSpec((1, H1), lambda i, s: (0, 0)),   # b1 (resident)
                pl.BlockSpec((H1, H2), lambda i, s: (0, 0)),  # W2 (resident)
                pl.BlockSpec((1, H2), lambda i, s: (0, 0)),   # b2 (resident)
            ],
            out_specs=pl.BlockSpec((TM, H2), lambda i, s: (i, 0)),
        ),
        compiler_params=pltpu.CompilerParams(
            dimension_semantics=("parallel",),
            vmem_limit_bytes=vmem_limit_bytes),
        cost_estimate=cost,
    )(seed_arr, x2d, w1b, b1_2d, w2b, b2_2d)

    return out2d.reshape(B, T, H2)


def _init_params(key, in_dim):
    """Deterministic init matching nn.Linear shapes (U(-1/sqrt(fan_in), +))."""
    k1, k2, k3, k4 = jax.random.split(key, 4)
    lim1 = 1.0 / np.sqrt(in_dim)
    lim2 = 1.0 / np.sqrt(256)
    # Stored already transposed for row-major matmul: x @ W.
    w1 = jax.random.uniform(k1, (in_dim, 256), jnp.float32, -lim1, lim1)
    b1 = jax.random.uniform(k2, (256,), jnp.float32, -lim1, lim1)
    w2 = jax.random.uniform(k3, (256, 128), jnp.float32, -lim2, lim2)
    b2 = jax.random.uniform(k4, (128,), jnp.float32, -lim2, lim2)
    return w1, b1, w2, b2


def _reference(x, w1, b1, w2, b2):
    h = jnp.maximum(jnp.einsum("btd,dh->bth", x, w1) + b1, 0.0)
    y = jnp.maximum(jnp.einsum("bth,hk->btk", h, w2) + b2, 0.0)
    return y


if __name__ == "__main__":
    key = jax.random.PRNGKey(0)
    kx, kp, kx2, kp2 = jax.random.split(key, 4)

    # --- Test 1: small shapes, eval mode (dropout = identity) -------------
    B, T, IN_DIM = 2, 8, 32
    x = jax.random.normal(kx, (B, T, IN_DIM), dtype=jnp.float32)
    w1, b1, w2, b2 = _init_params(kp, IN_DIM)

    out = jax.block_until_ready(prenet_forward(x, w1, b1, w2, b2, train=False))
    ref = _reference(x, w1, b1, w2, b2)
    # bf16 MXU matmul with f32 accumulation -> not bit-exact vs f32 reference.
    np.testing.assert_allclose(np.asarray(out), np.asarray(ref),
                               rtol=2e-2, atol=2e-2)
    assert out.shape == (B, T, 128)
    assert out.dtype == x.dtype

    # --- Test 2: multi-tile grid with a ragged edge (exercises pipelining) -
    B2, T2, IN_DIM2 = 2, 150, 256      # M = 300, TM = 128 -> 3 grid steps
    x2 = jax.random.normal(kx2, (B2, T2, IN_DIM2), dtype=jnp.float32)
    params2 = _init_params(kp2, IN_DIM2)
    out2 = jax.block_until_ready(prenet_forward(x2, *params2, tm=128))
    ref2 = _reference(x2, *params2)
    np.testing.assert_allclose(np.asarray(out2), np.asarray(ref2),
                               rtol=2e-2, atol=2e-2)

    # --- Test 3: bf16 output path (halved HBM writeback) -------------------
    out_bf = jax.block_until_ready(
        prenet_forward(x, w1, b1, w2, b2, train=False, out_dtype=jnp.bfloat16))
    assert out_bf.dtype == jnp.bfloat16
    np.testing.assert_allclose(np.asarray(out_bf, dtype=np.float32),
                               np.asarray(ref), rtol=5e-2, atol=5e-2)

    # --- Train mode (in-kernel hardware-PRNG dropout) ----------------------
    # The TPU PRNG primitives have no CPU/interpret lowering, so only run
    # this path when the default backend is a real TPU.
    if jax.default_backend() == "tpu":
        out_tr = jax.block_until_ready(
            prenet_forward(x, w1, b1, w2, b2, train=True, seed=123))
        assert out_tr.shape == (B, T, 128)
        assert bool(jnp.all(jnp.isfinite(out_tr)))
        # Dropout must zero a nontrivial fraction of the (ReLU-positive) outputs.
        assert float(jnp.mean(out_tr == 0.0)) > 0.25

    print("KERNEL_OK")
</pallas_src>

<mosaic_0001>
module attributes {stable_mosaic.version = 11 : i64} {
  func.func @_prenet_kernel(%arg0: i32, %arg1: memref<1xi32, #tpu.memory_space<smem>>, %arg2: memref<16x32xf32, #tpu.memory_space<vmem>>, %arg3: memref<32x256xbf16, #tpu.memory_space<vmem>>, %arg4: memref<1x256xf32, #tpu.memory_space<vmem>>, %arg5: memref<256x128xbf16, #tpu.memory_space<vmem>>, %arg6: memref<1x128xf32, #tpu.memory_space<vmem>>, %arg7: memref<16x128xf32, #tpu.memory_space<vmem>>) attributes {dimension_semantics = [#tpu.dimension_semantics<parallel>], iteration_bounds = array<i64: 1>, scalar_prefetch = 1 : i64, scratch_operands = 0 : i64, tpu.core_type = #tpu.core_type<tc>, window_params = [{transform_indices = @transform_0, window_bounds = array<i64: 16, 32>}, {pipeline_mode = #tpu.pipeline_mode<synchronous>, transform_indices = @transform_1, window_bounds = array<i64: 32, 256>}, {pipeline_mode = #tpu.pipeline_mode<synchronous>, transform_indices = @transform_2, window_bounds = array<i64: 1, 256>}, {pipeline_mode = #tpu.pipeline_mode<synchronous>, transform_indices = @transform_3, window_bounds = array<i64: 256, 128>}, {pipeline_mode = #tpu.pipeline_mode<synchronous>, transform_indices = @transform_4, window_bounds = array<i64: 1, 128>}, {transform_indices = @transform_5, window_bounds = array<i64: 16, 128>}]} {
    %c0 = arith.constant 0 : index
    %c0_0 = arith.constant 0 : index
    %0 = vector.load %arg2[%c0, %c0_0] : memref<16x32xf32, #tpu.memory_space<vmem>>, vector<16x32xf32>
    %1 = arith.truncf %0 : vector<16x32xf32> to vector<16x32xbf16>
    %c0_1 = arith.constant 0 : index
    %c0_2 = arith.constant 0 : index
    %2 = vector.load %arg3[%c0_1, %c0_2] : memref<32x256xbf16, #tpu.memory_space<vmem>>, vector<32x256xbf16>
    %cst = arith.constant dense<0.000000e+00> : vector<16x256xf32>
    %3 = tpu.matmul %1, %2, %cst {dimension_numbers = #tpu.dot_dimension_numbers<[1], [0], [0], [1], [0, 0, 1, 1], [], []>} : vector<16x32xbf16>, vector<32x256xbf16>, vector<16x256xf32> -> vector<16x256xf32>
    %c0_3 = arith.constant 0 : index
    %c0_4 = arith.constant 0 : index
    %4 = vector.load %arg4[%c0_3, %c0_4] : memref<1x256xf32, #tpu.memory_space<vmem>>, vector<1x256xf32>
    %5 = vector.broadcast %4 : vector<1x256xf32> to vector<16x256xf32>
    %6 = arith.addf %3, %5 : vector<16x256xf32>
    %cst_5 = arith.constant 0.000000e+00 : f32
    %7 = vector.broadcast %cst_5 : f32 to vector<16x256xf32>
    %8 = arith.maximumf %6, %7 : vector<16x256xf32>
    %9 = arith.truncf %8 : vector<16x256xf32> to vector<16x256xbf16>
    %c0_6 = arith.constant 0 : index
    %c0_7 = arith.constant 0 : index
    %10 = vector.load %arg5[%c0_6, %c0_7] : memref<256x128xbf16, #tpu.memory_space<vmem>>, vector<256x128xbf16>
    %cst_8 = arith.constant dense<0.000000e+00> : vector<16x128xf32>
    %11 = tpu.matmul %9, %10, %cst_8 {dimension_numbers = #tpu.dot_dimension_numbers<[1], [0], [0], [1], [0, 0, 1, 1], [], []>} : vector<16x256xbf16>, vector<256x128xbf16>, vector<16x128xf32> -> vector<16x128xf32>
    %c0_9 = arith.constant 0 : index
    %c0_10 = arith.constant 0 : index
    %12 = vector.load %arg6[%c0_9, %c0_10] : memref<1x128xf32, #tpu.memory_space<vmem>>, vector<1x128xf32>
    %13 = vector.broadcast %12 : vector<1x128xf32> to vector<16x128xf32>
    %14 = arith.addf %11, %13 : vector<16x128xf32>
    %cst_11 = arith.constant 0.000000e+00 : f32
    %15 = vector.broadcast %cst_11 : f32 to vector<16x128xf32>
    %16 = arith.maximumf %14, %15 : vector<16x128xf32>
    %c0_12 = arith.constant 0 : index
    %c0_13 = arith.constant 0 : index
    %17 = vector.load %arg7[%c0_12, %c0_13] : memref<16x128xf32, #tpu.memory_space<vmem>>, vector<16x128xf32>
    tpu.vector_store %arg7[%c0_12, %c0_13], %16 {strides = array<i32>} : memref<16x128xf32, #tpu.memory_space<vmem>>, vector<16x128xf32>,
    return
  }
  func.func @transform_0(%arg0: i32, %arg1: memref<1xi32, #tpu.memory_space<smem>>) -> (i32, i32) {
    %c0_i32 = arith.constant 0 : i32
    %c0_i32_0 = arith.constant 0 : i32
    return %arg0, %c0_i32 : i32, i32
  }
  func.func @transform_1(%arg0: i32, %arg1: memref<1xi32, #tpu.memory_space<smem>>) -> (i32, i32) {
    %c0_i32 = arith.constant 0 : i32
    %c0_i32_0 = arith.constant 0 : i32
    %c0_i32_1 = arith.constant 0 : i32
    return %c0_i32, %c0_i32_0 : i32, i32
  }
  func.func @transform_2(%arg0: i32, %arg1: memref<1xi32, #tpu.memory_space<smem>>) -> (i32, i32) {
    %c0_i32 = arith.constant 0 : i32
    %c0_i32_0 = arith.constant 0 : i32
    %c0_i32_1 = arith.constant 0 : i32
    return %c0_i32, %c0_i32_0 : i32, i32
  }
  func.func @transform_3(%arg0: i32, %arg1: memref<1xi32, #tpu.memory_space<smem>>) -> (i32, i32) {
    %c0_i32 = arith.constant 0 : i32
    %c0_i32_0 = arith.constant 0 : i32
    %c0_i32_1 = arith.constant 0 : i32
    return %c0_i32, %c0_i32_0 : i32, i32
  }
  func.func @transform_4(%arg0: i32, %arg1: memref<1xi32, #tpu.memory_space<smem>>) -> (i32, i32) {
    %c0_i32 = arith.constant 0 : i32
    %c0_i32_0 = arith.constant 0 : i32
    %c0_i32_1 = arith.constant 0 : i32
    return %c0_i32, %c0_i32_0 : i32, i32
  }
  func.func @transform_5(%arg0: i32, %arg1: memref<1xi32, #tpu.memory_space<smem>>) -> (i32, i32) {
    %c0_i32 = arith.constant 0 : i32
    %c0_i32_0 = arith.constant 0 : i32
    return %arg0, %c0_i32 : i32, i32
  }
}

</mosaic_0001>

<llo_original>
// kernel: tpu_custom_call.1
$region0: #{tpu_custom_call.1}
  #allocation0 [shape = 'u32[]', space=smem, size = 0x4, offset = 0x4, fixed_abs, tag = 'smem constant byte address 0x4 - core index']
  #allocation1 [shape = 'u32[144,128]{1,0:T(1,128)}', space=vmem, size = 0x12000, scoped, tag = 'internal scratch']
  #allocation2 [shape = 's32[1]{0}', space=sflag, size = 0x4, scoped, tag = 'scoped memory for tpu_custom_call.1']
  #allocation3 [shape = 's32[1]{0:T(128)S(6)}', space=smem, size = 0x200, scoped, tag = 'prefetched SMEM operand 0']
  %s0 = inlined_call_operand.<no memory space> [shape: s32[1], index: 0, kind: input, shape index: {}]
  %s1 = inlined_call_operand.hbm [shape: f32[16,32], index: 1, kind: input, shape index: {}]
  %s2 = inlined_call_operand.hbm [shape: bf16[32,256], index: 2, kind: input, shape index: {}]
  %s3 = inlined_call_operand.vmem [shape: f32[1,256], index: 3, kind: input, shape index: {}]
  %s4 = inlined_call_operand.hbm [shape: bf16[256,128], index: 4, kind: input, shape index: {}]
  %s5 = inlined_call_operand.vmem [shape: f32[1,128], index: 5, kind: input, shape index: {}]
  %s6 = inlined_call_operand.hbm [shape: f32[16,128], index: 6, kind: output, shape index: {}]
  %s7 = sld [smem:[#allocation0]]
  $region42: #{tpu_custom_call.1} parent=0
    _
  %s9 = ssub.s32 1, %s7
  %s10 = scalar_select 0, %s9, %s7
  %11 = sst [smem:[#allocation3]] %s0
  $region1: #{tpu_custom_call.1} parent=0
    #allocation4 [shape = 'u8[8192]{0}', space=vmem, size = 0x2000, scoped, tag = 'input window, operand 1, single buffered']
    #allocation5 [shape = 's32[1]{0}', space=sflag, size = 0x4, scoped, tag = 'scoped memory for tpu_custom_call.1']
    #allocation6 [shape = 's32[1]{0}', space=sflag, size = 0x4, scoped, tag = 'scoped memory for tpu_custom_call.1']
    #allocation7 [shape = 'u8[16384]{0}', space=vmem, size = 0x4000, scoped, tag = 'input window, operand 2, single buffered']
    #allocation8 [shape = 's32[1]{0}', space=sflag, size = 0x4, scoped, tag = 'scoped memory for tpu_custom_call.1']
    #allocation9 [shape = 'u8[65536]{0}', space=vmem, size = 0x10000, scoped, tag = 'input window, operand 4, single buffered']
    #allocation10 [shape = 'u8[8192]{0}', space=vmem, size = 0x2000, scoped, tag = 'output window, operand 0, single buffered']
    %12 = vsyncpa [#allocation5], 0
    %13 = vsyncpa [#allocation8], 0
    %14 = vsyncpa [#allocation6], 0
    // Predicated region
    $region2: #{tpu_custom_call.1} parent=1 // pred_check
      _
    $region3: #{tpu_custom_call.1} parent=1 // pred_check_branch
      %16 = sbr.rel (0) target = $region5
    $region4: #{tpu_custom_call.1} parent=1 // pred_region
      %s18 = ssub.s32 256, 256
      %19 = vsyncadd [#allocation5], %s18
      %s20 = sshll.u32 [#allocation4], 4
      %s21 = int_to_ptr.vmem [resolvable:$true] %s20
      %26 = dma.hbm_to_vmem [thread:$0]  %s1, 256, %s21, [#allocation5], 128, 128, 8
    $region5: #{tpu_custom_call.1} parent=1 // pred_fallthru
      _
    // Predicated region
    $region6: #{tpu_custom_call.1} parent=1 // pred_check
      _
    $region7: #{tpu_custom_call.1} parent=1 // pred_check_branch
      %28 = sbr.rel (0) target = $region9
    $region8: #{tpu_custom_call.1} parent=1 // pred_region
      %s30 = ssub.s32 512, 512
      %31 = vsyncadd [#allocation8], %s30
      %s32 = sshll.u32 [#allocation7], 4
      %s33 = int_to_ptr.vmem [resolvable:$true] %s32
      %38 = dma.hbm_to_vmem [thread:$0]  %s2, 512, %s33, [#allocation8], 128, 128, 8
    $region9: #{tpu_custom_call.1} parent=1 // pred_fallthru
      _
    // Predicated region
    $region10: #{tpu_custom_call.1} parent=1 // pred_check
      _
    $region11: #{tpu_custom_call.1} parent=1 // pred_check_branch
      %40 = sbr.rel (0) target = $region13
    $region12: #{tpu_custom_call.1} parent=1 // pred_region
      _
    $region13: #{tpu_custom_call.1} parent=1 // pred_fallthru
      _
    // Predicated region
    $region14: #{tpu_custom_call.1} parent=1 // pred_check
      _
    $region15: #{tpu_custom_call.1} parent=1 // pred_check_branch
      %42 = sbr.rel (0) target = $region17
    $region16: #{tpu_custom_call.1} parent=1 // pred_region
      %s44 = ssub.s32 2048, 2048
      %45 = vsyncadd [#allocation8], %s44
      %s46 = sshll.u32 [#allocation9], 4
      %s47 = int_to_ptr.vmem [resolvable:$true] %s46
      %52 = dma.hbm_to_vmem [thread:$0]  %s4, 2048, %s47, [#allocation8], 64, 64, 4
    $region17: #{tpu_custom_call.1} parent=1 // pred_fallthru
      _
    // Predicated region
    $region18: #{tpu_custom_call.1} parent=1 // pred_check
      _
    $region19: #{tpu_custom_call.1} parent=1 // pred_check_branch
      %54 = sbr.rel (0) target = $region21
    $region20: #{tpu_custom_call.1} parent=1 // pred_region
      _
    $region21: #{tpu_custom_call.1} parent=1 // pred_fallthru
      _
    // Predicated region
    $region22: #{tpu_custom_call.1} parent=1 // pred_check
      _
    $region23: #{tpu_custom_call.1} parent=1 // pred_check_branch
      %56 = sbr.rel (0) target = $region25
    $region24: #{tpu_custom_call.1} parent=1 // pred_region
      %57 = dma.done [#allocation5], 256
    $region25: #{tpu_custom_call.1} parent=1 // pred_fallthru
      _
    // Predicated region
    $region26: #{tpu_custom_call.1} parent=1 // pred_check
      _
    $region27: #{tpu_custom_call.1} parent=1 // pred_check_branch
      %59 = sbr.rel (0) target = $region29
    $region28: #{tpu_custom_call.1} parent=1 // pred_region
      %60 = dma.done [#allocation8], 512
    $region29: #{tpu_custom_call.1} parent=1 // pred_fallthru
      _
    // Predicated region
    $region30: #{tpu_custom_call.1} parent=1 // pred_check
      _
    $region31: #{tpu_custom_call.1} parent=1 // pred_check_branch
      %62 = sbr.rel (0) target = $region33
    $region32: #{tpu_custom_call.1} parent=1 // pred_region
      %63 = dma.done [#allocation8], 2048
    $region33: #{tpu_custom_call.1} parent=1 // pred_fallthru
      _
    %v65 = vld [vmem:[#allocation4] sm:$0xff]
    %v66 = vld [vmem:[#allocation4 + $0x8] sm:$0xff]
    %v67 = vpack.c.bf16 %v66, %v65
    %v68 = vld [vmem:[#allocation7] sm:$0xff]
    %v69 = vld [vmem:[#allocation7 + $0x8] sm:$0xff]
    %v70 = vld [vmem:[#allocation7 + $0x10] sm:$0xff]
    %v71 = vld [vmem:[#allocation7 + $0x18] sm:$0xff]
    %v72 = vld [vmem:[%s3] sm:$0x3]
    %v74 = vlaneseq
    %v75 = vshrl.u32 %v74, 7
    %v76 = vsub.s32 0, %v75
    %v77 = vrot.slane %v72, %v76
    %v78 = vlaneseq
    %v79 = vshrl.u32 %v78, 7
    %v80 = vsub.s32 1, %v79
    %v81 = vrot.slane %v72, %v80
    %v88 = vunpack.c.l.b16 %v68
    %v89 = vunpack.c.h.b16 %v68
    %v90 = vunpack.c.l.b16 %v69
    %v91 = vunpack.c.h.b16 %v69
    %v92 = vunpack.c.l.b16 %v70
    %v93 = vunpack.c.h.b16 %v70
    %v94 = vunpack.c.l.b16 %v71
    %v95 = vunpack.c.h.b16 %v71
    %v96 = vpack.c.b16 %v90, %v88
    %v97 = vpack.c.b16 %v91, %v89
    %v98 = vpack.c.b16 %v94, %v92
    %v99 = vpack.c.b16 %v95, %v93
    %vm104 = vcmask 261120
    %v106 = vsel %vm104, %v67, 0
    %108 = vmatprep.subr.bf16.mxu0 0
    %109 = vmatpush1.bf16.msra.mxu0 0
    %110 = vmatprep.subr.bf16.mxu0 0
    %111 = vmatpush1.bf16.msra.mxu0 0
    %112 = vmatprep.subr.bf16.mxu0 0
    %113 = vmatpush1.bf16.msra.mxu0 0
    %114 = vmatprep.subr.bf16.mxu0 0
    %115 = vmatpush1.bf16.msra.mxu0 0
    %116 = vmatprep.subr.bf16.mxu0 0
    %117 = vmatpush1.bf16.msra.mxu0 0
    %118 = vmatprep.subr.bf16.mxu0 0
    %119 = vmatpush1.bf16.msra.mxu0 0
    %120 = vmatprep.subr.bf16.mxu0 %v99
    %121 = vmatpush1.bf16.msra.mxu0 %v98
    %122 = vmatprep.subr.bf16.mxu0 %v97
    %123 = vmatpush1.bf16.msra.mxu0 %v96
    %124 = vmatprep.subr.bf16.mxu0 0
    %125 = vmatpush2.bf16.msra.mxu0 0
    %126 = vmatprep.subr.bf16.mxu0 0
    %127 = vmatpush2.bf16.msra.mxu0 0
    %128 = vmatprep.subr.bf16.mxu0 0
    %129 = vmatpush2.bf16.msra.mxu0 0
    %130 = vmatprep.subr.bf16.mxu0 0
    %131 = vmatpush2.bf16.msra.mxu0 0
    %132 = vmatprep.subr.bf16.mxu0 0
    %133 = vmatpush2.bf16.msra.mxu0 0
    %134 = vmatprep.subr.bf16.mxu0 0
    %135 = vmatpush2.bf16.msra.mxu0 0
    %136 = vmatprep.subr.bf16.mxu0 0
    %137 = vmatpush2.bf16.msra.mxu0 0
    %138 = vmatprep.subr.bf16.mxu0 0
    %139 = vmatpush2.bf16.msra.mxu0 0
    %140 = vmatprep.mubr.bf16.mxu0 0
    %141 = vmatmul.mubr.bf16.gmra.mxu0 %v106
    %v142 = vpop.f32.mrf.mxu0
    %v143 = vadd.f32 %v77, %v142
    %v144 = vpop.f32.mrf.mxu0
    %v145 = vadd.f32 %v81, %v144
    %v146 = vpop.f32.mrf.mxu0
    %v147 = vadd.f32 %v77, %v146
    %v148 = vpop.f32.mrf.mxu0
    %v149 = vadd.f32 %v81, %v148
    %150 = vdwg.mxu0
    %v151 = vmax.f32 %v143, 0.0
    %v152 = vmax.f32 %v145, 0.0
    %v153 = vmax.f32 %v147, 0.0
    %v154 = vmax.f32 %v149, 0.0
    %v155 = vpack.c.bf16 %v153, %v151
    %v156 = vpack.c.bf16 %v154, %v152
    %v157 = vld [vmem:[#allocation9] sm:$0xf]
    %v158 = vld [vmem:[#allocation9 + $0x4] sm:$0xf]
    %v159 = vld [vmem:[#allocation9 + $0x8] sm:$0xf]
    %v160 = vld [vmem:[#allocation9 + $0xc] sm:$0xf]
    %v161 = vld [vmem:[#allocation9 + $0x10] sm:$0xf]
    %v162 = vld [vmem:[#allocation9 + $0x14] sm:$0xf]
    %v163 = vld [vmem:[#allocation9 + $0x18] sm:$0xf]
    %v164 = vld [vmem:[#allocation9 + $0x1c] sm:$0xf]
    %v165 = vld [vmem:[#allocation9 + $0x20] sm:$0xf]
    %v166 = vld [vmem:[#allocation9 + $0x24] sm:$0xf]
    %v167 = vld [vmem:[#allocation9 + $0x28] sm:$0xf]
    %v168 = vld [vmem:[#allocation9 + $0x2c] sm:$0xf]
    %v169 = vld [vmem:[#allocation9 + $0x30] sm:$0xf]
    %v170 = vld [vmem:[#allocation9 + $0x34] sm:$0xf]
    %v171 = vld [vmem:[#allocation9 + $0x38] sm:$0xf]
    %v172 = vld [vmem:[#allocation9 + $0x3c] sm:$0xf]
    %v173 = vld [vmem:[#allocation9 + $0x40] sm:$0xf]
    %v174 = vld [vmem:[#allocation9 + $0x44] sm:$0xf]
    %v175 = vld [vmem:[#allocation9 + $0x48] sm:$0xf]
    %v176 = vld [vmem:[#allocation9 + $0x4c] sm:$0xf]
    %v177 = vld [vmem:[#allocation9 + $0x50] sm:$0xf]
    %v178 = vld [vmem:[#allocation9 + $0x54] sm:$0xf]
    %v179 = vld [vmem:[#allocation9 + $0x58] sm:$0xf]
    %v180 = vld [vmem:[#allocation9 + $0x5c] sm:$0xf]
    %v181 = vld [vmem:[#allocation9 + $0x60] sm:$0xf]
    %v182 = vld [vmem:[#allocation9 + $0x64] sm:$0xf]
    %v183 = vld [vmem:[#allocation9 + $0x68] sm:$0xf]
    %v184 = vld [vmem:[#allocation9 + $0x6c] sm:$0xf]
    %v185 = vld [vmem:[#allocation9 + $0x70] sm:$0xf]
    %v186 = vld [vmem:[#allocation9 + $0x74] sm:$0xf]
    %v187 = vld [vmem:[#allocation9 + $0x78] sm:$0xf]
    %v188 = vld [vmem:[#allocation9 + $0x7c] sm:$0xf]
    %v189 = vld [vmem:[%s5] sm:$0x1]
    %v191 = vlaneseq
    %v192 = vshrl.u32 %v191, 7
    %v193 = vsub.s32 0, %v192
    %v194 = vrot.slane %v189, %v193
    %v228 = vunpack.c.l.b16 %v157
    %v229 = vunpack.c.l.b16 %v158
    %v230 = vunpack.c.l.b16 %v159
    %v231 = vunpack.c.l.b16 %v160
    %v232 = vunpack.c.l.b16 %v161
    %v233 = vunpack.c.l.b16 %v162
    %v234 = vunpack.c.l.b16 %v163
    %v235 = vunpack.c.l.b16 %v164
    %v236 = vunpack.c.l.b16 %v165
    %v237 = vunpack.c.l.b16 %v166
    %v238 = vunpack.c.l.b16 %v167
    %v239 = vunpack.c.l.b16 %v168
    %v240 = vunpack.c.l.b16 %v169
    %v241 = vunpack.c.l.b16 %v170
    %v242 = vunpack.c.l.b16 %v171
    %v243 = vunpack.c.l.b16 %v172
    %v244 = vunpack.c.l.b16 %v173
    %v245 = vunpack.c.l.b16 %v174
    %v246 = vunpack.c.l.b16 %v175
    %v247 = vunpack.c.l.b16 %v176
    %v248 = vunpack.c.l.b16 %v177
    %v249 = vunpack.c.l.b16 %v178
    %v250 = vunpack.c.l.b16 %v179
    %v251 = vunpack.c.l.b16 %v180
    %v252 = vunpack.c.l.b16 %v181
    %v253 = vunpack.c.l.b16 %v182
    %v254 = vunpack.c.l.b16 %v183
    %v255 = vunpack.c.l.b16 %v184
    %v256 = vunpack.c.l.b16 %v185
    %v257 = vunpack.c.l.b16 %v186
    %v258 = vunpack.c.l.b16 %v187
    %v259 = vunpack.c.l.b16 %v188
    %v260 = vpack.c.b16 %v229, %v228
    %v261 = vpack.c.b16 %v231, %v230
    %v262 = vpack.c.b16 %v233, %v232
    %v263 = vpack.c.b16 %v235, %v234
    %v264 = vpack.c.b16 %v237, %v236
    %v265 = vpack.c.b16 %v239, %v238
    %v266 = vpack.c.b16 %v241, %v240
    %v267 = vpack.c.b16 %v243, %v242
    %v268 = vpack.c.b16 %v245, %v244
    %v269 = vpack.c.b16 %v247, %v246
    %v270 = vpack.c.b16 %v249, %v248
    %v271 = vpack.c.b16 %v251, %v250
    %v272 = vpack.c.b16 %v253, %v252
    %v273 = vpack.c.b16 %v255, %v254
    %v274 = vpack.c.b16 %v257, %v256
    %v275 = vpack.c.b16 %v259, %v258
    %292 = vmatprep.subr.bf16.mxu0 0
    %293 = vmatpush1.bf16.msra.mxu0 %v267
    %294 = vmatprep.subr.bf16.mxu0 0
    %295 = vmatpush1.bf16.msra.mxu0 %v266
    %296 = vmatprep.subr.bf16.mxu0 0
    %297 = vmatpush1.bf16.msra.mxu0 %v265
    %298 = vmatprep.subr.bf16.mxu0 0
    %299 = vmatpush1.bf16.msra.mxu0 %v264
    %300 = vmatprep.subr.bf16.mxu0 0
    %301 = vmatpush1.bf16.msra.mxu0 %v263
    %302 = vmatprep.subr.bf16.mxu0 0
    %303 = vmatpush1.bf16.msra.mxu0 %v262
    %304 = vmatprep.subr.bf16.mxu0 0
    %305 = vmatpush1.bf16.msra.mxu0 %v261
    %306 = vmatprep.subr.bf16.mxu0 0
    %307 = vmatpush1.bf16.msra.mxu0 %v260
    %308 = vmatprep.subr.bf16.mxu0 0
    %309 = vmatpush2.bf16.msra.mxu0 %v275
    %310 = vmatprep.subr.bf16.mxu0 0
    %311 = vmatpush2.bf16.msra.mxu0 %v274
    %312 = vmatprep.subr.bf16.mxu0 0
    %313 = vmatpush2.bf16.msra.mxu0 %v273
    %314 = vmatprep.subr.bf16.mxu0 0
    %315 = vmatpush2.bf16.msra.mxu0 %v272
    %316 = vmatprep.subr.bf16.mxu0 0
    %317 = vmatpush2.bf16.msra.mxu0 %v271
    %318 = vmatprep.subr.bf16.mxu0 0
    %319 = vmatpush2.bf16.msra.mxu0 %v270
    %320 = vmatprep.subr.bf16.mxu0 0
    %321 = vmatpush2.bf16.msra.mxu0 %v269
    %322 = vmatprep.subr.bf16.mxu0 0
    %323 = vmatpush2.bf16.msra.mxu0 %v268
    %324 = vmatprep.mubr.bf16.mxu0 %v156
    %325 = vmatmul.mubr.bf16.gmra.mxu0 %v155
    %v326 = vpop.f32.mrf.mxu0
    %v327 = vadd.f32 %v194, %v326
    %v328 = vpop.f32.mrf.mxu0
    %v329 = vpop.f32.mrf.mxu0
    %v330 = vadd.f32 %v194, %v329
    %v331 = vpop.f32.mrf.mxu0
    %332 = vdwg.mxu0
    %v333 = vmax.f32 %v327, 0.0
    %v334 = vmax.f32 %v330, 0.0
    %335 = vst [vmem:[#allocation10] sm:$0xff] %v333
    %336 = vst [vmem:[#allocation10 + $0x8] sm:$0xff] %v334
    // Predicated region
    $region34: #{tpu_custom_call.1} parent=1 // pred_check
      _
    $region35: #{tpu_custom_call.1} parent=1 // pred_check_branch
      %338 = sbr.rel (0) target = $region37
    $region36: #{tpu_custom_call.1} parent=1 // pred_region
      %s340 = ssub.s32 256, 256
      %341 = vsyncadd [#allocation6], %s340
      %s342 = sshll.u32 [#allocation10], 4
      %s343 = int_to_ptr.vmem [resolvable:$true] %s342
      %348 = dma.vmem_to_hbm [thread:$0]  %s343, 256, %s6, [#allocation6], 128, 128, 8
    $region37: #{tpu_custom_call.1} parent=1 // pred_fallthru
      _
    // Predicated region
    $region38: #{tpu_custom_call.1} parent=1 // pred_check
      _
    $region39: #{tpu_custom_call.1} parent=1 // pred_check_branch
      %350 = sbr.rel (0) target = $region41
    $region40: #{tpu_custom_call.1} parent=1 // pred_region
      %351 = dma.done [#allocation6], 256
    $region41: #{tpu_custom_call.1} parent=1 // pred_fallthru
      _
    %352 = vsyncpa [#allocation5], 1
    %353 = vsyncpa [#allocation8], 1
    %354 = vsyncpa [#allocation6], 1

</llo_original>
